<compile_context>
chip_gen: v6e
topology: v6e:2x2x1
jax: 0.10.0
libtpu: 0.0.40
codegen_flags: <defaults>
</compile_context>

<pallas_src>
import jax
import jax.numpy as jnp
import numpy as np
from jax.experimental import pallas as pl
from jax.experimental.pallas import tpu as pltpu

# ----------------------------- problem sizes -------------------------------
N = 8            # number of nodes
M = 3            # number of metapath patterns
OUT_SIZE = 16    # GraphConv "out_size" (passthrough since weight=None)
HEADS = 2        # layer_num_heads
D = OUT_SIZE * HEADS   # feature dim seen by semantic attention (= in_size)
H = 128          # SemanticAttention hidden_size (PyTorch default)


# ------------------------------- kernel ------------------------------------
def han_kernel(a_ref, h_ref, w1_ref, b1_ref, w2t_ref, out_ref):
    """Full HANLayer forward for all M metapaths in one un-gridded block."""
    a = a_ref[...]            # (M, N, N) raw 0/1 adjacency, A[m, dst, src]
    h = h_ref[...]            # (N, D) f32
    w1 = w1_ref[...]          # (D, H)
    b1 = b1_ref[...]          # (1, H)
    w2t = w2t_ref[...]        # (H, 1)  (w2 passed transposed from the wrapper)

    # --- GraphConv(norm='both') normalization, vectorized over M -----------
    # in-degree = sum over src (axis=2), out-degree = sum over dst (axis=1).
    din = jax.lax.rsqrt(jnp.maximum(jnp.sum(a, axis=2, keepdims=True), 1.0))   # (M, N, 1)
    dout = jax.lax.rsqrt(jnp.maximum(jnp.sum(a, axis=1, keepdims=True), 1.0))  # (M, 1, N)
    a_norm = a * din * dout                                                    # (M, N, N)
    a_flat = a_norm.reshape(M * N, N)      # tile-preserving: N=8 is sublane-aligned

    # --- all M GraphConv aggregations in ONE MXU pass -----------------------
    z_all = jnp.dot(a_flat, h, preferred_element_type=jnp.float32)   # (M*N, D)

    # --- semantic attention: Linear(D,H) -> tanh, batched over M*N rows -----
    t_all = jnp.tanh(
        jnp.dot(z_all, w1, preferred_element_type=jnp.float32) + b1)  # (M*N, H)

    # per-metapath mean over nodes FUSED before the w2 projection
    # (mean commutes with the bias-free Linear(H,1)).
    t_mean = jnp.mean(t_all.reshape(M, N, H), axis=1)                 # (M, H)
    scores = jnp.dot(t_mean, w2t, preferred_element_type=jnp.float32) # (M, 1)

    # vector softmax over the M metapath scores
    smax = jnp.max(scores, axis=0, keepdims=True)                     # (1, 1)
    exps = jnp.exp(scores - smax)                                     # (M, 1)
    denom = jnp.sum(exps, axis=0, keepdims=True)                      # (1, 1)
    # exact reciprocal keeps the rtol=1e-4/atol=1e-5 check; approx=True (EUP vrcp)
    # is a micro-win only.
    beta = exps * pl.reciprocal(denom, approx=False)                  # (M, 1)

    # softmax-weighted sum of per-metapath embeddings
    z = z_all.reshape(M, N, D)                                        # (M, N, D)
    out = jnp.sum(z * beta[:, :, None], axis=0)                       # (N, D)

    # TODO(synk): D=32 < 128 lanes -> masked vst on the write path; for stacked /
    # batched use, emit a lane-dense slab (last dim multiple of 128) and reshape
    # in the wrapper instead.
    out_ref[...] = out.astype(out_ref.dtype)


# ------------------------------ wrapper -------------------------------------
def han_layer_forward(adj, h, w1, b1, w2):
    """adj: (M,N,N) RAW 0/1 metapath adjacencies, h: (N,D). Returns (N,D)."""
    m, n, _ = adj.shape
    d = h.shape[1]
    # TODO(synk): for realistic N (thousands of nodes) re-tile: grid over dst-row
    # tiles marked "parallel" (feeds both v7x TensorCores), src/K axis last and
    # "arbitrary", A tiles sized from pltpu.get_tpu_info().vmem_capacity_bytes
    # (64 MiB on v7x vs 128 MiB on v5e/v6e) with vmem_limit_bytes set explicitly,
    # bf16 A/h operands with f32 accumulation, degree vectors precomputed in the
    # wrapper so A is read from HBM exactly once, and per-metapath score means
    # accumulated in SMEM scratch with a finalize pass for the softmax-weighted sum.
    # TODO(synk): if this layer is called repeatedly (stacked layers / batch of
    # graphs), batch along the lane dim (h as (N, B*D)) or add a leading grid axis
    # instead of one tiny un-gridded call per layer.
    vmem = pl.BlockSpec(memory_space=pltpu.MemorySpace.VMEM)
    return pl.pallas_call(
        han_kernel,
        out_shape=jax.ShapeDtypeStruct((n, d), jnp.float32),
        in_specs=[vmem, vmem, vmem, vmem, vmem],
        out_specs=vmem,
    )(adj, h, w1, b1, w2.T)   # w2 passed transposed: (H, 1)


# -------------------------- pure-JAX reference -------------------------------
def normalize_adjacency(adj):
    """DGL GraphConv norm='both' symmetric normalization, degrees clamped to >=1."""
    deg_in = jnp.clip(adj.sum(axis=2), 1.0, None)   # (M, N) dst in-degrees
    deg_out = jnp.clip(adj.sum(axis=1), 1.0, None)  # (M, N) src out-degrees
    return deg_in[:, :, None] ** -0.5 * adj * deg_out[:, None, :] ** -0.5


def han_layer_reference(adj, h, w1, b1, w2):
    a_norm = normalize_adjacency(adj)
    z = jnp.einsum("mij,jd->imd", a_norm, h)                  # (N, M, D) stacked embeddings
    proj = jnp.tanh(z @ w1 + b1) @ w2.T                       # (N, M, 1)
    w = proj.mean(axis=0)                                     # (M, 1)
    beta = jax.nn.softmax(w, axis=0)                          # (M, 1)
    return (beta[None, :, :] * z).sum(axis=1)                 # (N, D)


# --------------------------------- main --------------------------------------
if __name__ == "__main__":
    key = jax.random.PRNGKey(0)
    k_adj, k_h, k_w1, k_b1, k_w2 = jax.random.split(key, 5)

    # synthetic per-metapath reachability graphs (dense 0/1 adjacency, raw)
    adj = (jax.random.uniform(k_adj, (M, N, N)) < 0.4).astype(jnp.float32)

    h = jax.random.normal(k_h, (N, D), dtype=jnp.float32)

    # SemanticAttention parameters (deterministic synthetic init)
    w1 = jax.random.normal(k_w1, (D, H), dtype=jnp.float32) * 0.1
    b1 = jax.random.normal(k_b1, (1, H), dtype=jnp.float32) * 0.1
    w2 = jax.random.normal(k_w2, (1, H), dtype=jnp.float32) * 0.1

    out = han_layer_forward(adj, h, w1, b1, w2)
    out = jax.block_until_ready(out)

    ref = jax.block_until_ready(han_layer_reference(adj, h, w1, b1, w2))
    assert out.shape == (N, D), out.shape
    np.testing.assert_allclose(np.asarray(out), np.asarray(ref), rtol=1e-4, atol=1e-5)

    print("KERNEL_OK")
</pallas_src>

<mosaic_0001>
module attributes {stable_mosaic.version = 11 : i64} {
  func.func @han_kernel(%arg0: memref<3x8x8xf32, #tpu.memory_space<vmem>>, %arg1: memref<8x32xf32, #tpu.memory_space<vmem>>, %arg2: memref<32x128xf32, #tpu.memory_space<vmem>>, %arg3: memref<1x128xf32, #tpu.memory_space<vmem>>, %arg4: memref<128x1xf32, #tpu.memory_space<vmem>>, %arg5: memref<8x32xf32, #tpu.memory_space<vmem>>) attributes {dimension_semantics = [], scalar_prefetch = 0 : i64, scratch_operands = 0 : i64, tpu.core_type = #tpu.core_type<tc>} {
    %c0 = arith.constant 0 : index
    %c0_0 = arith.constant 0 : index
    %c0_1 = arith.constant 0 : index
    %0 = vector.load %arg0[%c0, %c0_0, %c0_1] : memref<3x8x8xf32, #tpu.memory_space<vmem>>, vector<3x8x8xf32>
    %c0_2 = arith.constant 0 : index
    %c0_3 = arith.constant 0 : index
    %1 = vector.load %arg1[%c0_2, %c0_3] : memref<8x32xf32, #tpu.memory_space<vmem>>, vector<8x32xf32>
    %c0_4 = arith.constant 0 : index
    %c0_5 = arith.constant 0 : index
    %2 = vector.load %arg2[%c0_4, %c0_5] : memref<32x128xf32, #tpu.memory_space<vmem>>, vector<32x128xf32>
    %c0_6 = arith.constant 0 : index
    %c0_7 = arith.constant 0 : index
    %3 = vector.load %arg3[%c0_6, %c0_7] : memref<1x128xf32, #tpu.memory_space<vmem>>, vector<1x128xf32>
    %c0_8 = arith.constant 0 : index
    %c0_9 = arith.constant 0 : index
    %4 = vector.load %arg4[%c0_8, %c0_9] : memref<128x1xf32, #tpu.memory_space<vmem>>, vector<128x1xf32>
    %cst = arith.constant dense<0.000000e+00> : vector<3x8xf32>
    %5 = vector.multi_reduction <add>, %0, %cst [2] : vector<3x8x8xf32> to vector<3x8xf32>
    %6 = vector.shape_cast %5 : vector<3x8xf32> to vector<3x8x1xf32>
    %cst_10 = arith.constant 1.000000e+00 : f32
    %7 = vector.broadcast %cst_10 : f32 to vector<3x8x1xf32>
    %8 = arith.maximumf %6, %7 : vector<3x8x1xf32>
    %9 = math.rsqrt %8 : vector<3x8x1xf32>
    %cst_11 = arith.constant dense<0.000000e+00> : vector<3x8xf32>
    %10 = vector.multi_reduction <add>, %0, %cst_11 [1] : vector<3x8x8xf32> to vector<3x8xf32>
    %11 = vector.shape_cast %10 : vector<3x8xf32> to vector<3x1x8xf32>
    %cst_12 = arith.constant 1.000000e+00 : f32
    %12 = vector.broadcast %cst_12 : f32 to vector<3x1x8xf32>
    %13 = arith.maximumf %11, %12 : vector<3x1x8xf32>
    %14 = math.rsqrt %13 : vector<3x1x8xf32>
    %15 = vector.broadcast %9 : vector<3x8x1xf32> to vector<3x8x8xf32>
    %16 = arith.mulf %0, %15 : vector<3x8x8xf32>
    %17 = vector.broadcast %14 : vector<3x1x8xf32> to vector<3x8x8xf32>
    %18 = arith.mulf %16, %17 : vector<3x8x8xf32>
    %19 = vector.shape_cast %18 : vector<3x8x8xf32> to vector<24x8xf32>
    %cst_13 = arith.constant dense<0.000000e+00> : vector<24x32xf32>
    %20 = tpu.matmul %19, %1, %cst_13 {dimension_numbers = #tpu.dot_dimension_numbers<[1], [0], [0], [1], [0, 0, 1, 1], [], []>} : vector<24x8xf32>, vector<8x32xf32>, vector<24x32xf32> -> vector<24x32xf32>
    %cst_14 = arith.constant dense<0.000000e+00> : vector<24x128xf32>
    %21 = tpu.matmul %20, %2, %cst_14 {dimension_numbers = #tpu.dot_dimension_numbers<[1], [0], [0], [1], [0, 0, 1, 1], [], []>} : vector<24x32xf32>, vector<32x128xf32>, vector<24x128xf32> -> vector<24x128xf32>
    %22 = vector.broadcast %3 : vector<1x128xf32> to vector<24x128xf32>
    %23 = arith.addf %21, %22 : vector<24x128xf32>
    %24 = math.tanh %23 : vector<24x128xf32>
    %25 = vector.shape_cast %24 : vector<24x128xf32> to vector<3x8x128xf32>
    %cst_15 = arith.constant dense<0.000000e+00> : vector<3x128xf32>
    %26 = vector.multi_reduction <add>, %25, %cst_15 [1] : vector<3x8x128xf32> to vector<3x128xf32>
    %cst_16 = arith.constant 8.000000e+00 : f32
    %27 = vector.broadcast %cst_16 : f32 to vector<3x128xf32>
    %28 = arith.divf %26, %27 : vector<3x128xf32>
    %cst_17 = arith.constant dense<0.000000e+00> : vector<3x1xf32>
    %29 = tpu.matmul %28, %4, %cst_17 {dimension_numbers = #tpu.dot_dimension_numbers<[1], [0], [0], [1], [0, 0, 1, 1], [], []>} : vector<3x128xf32>, vector<128x1xf32>, vector<3x1xf32> -> vector<3x1xf32>
    %cst_18 = arith.constant dense<0xFF800000> : vector<1xf32>
    %30 = vector.multi_reduction <maximumf>, %29, %cst_18 [0] : vector<3x1xf32> to vector<1xf32>
    %31 = vector.shape_cast %30 : vector<1xf32> to vector<1x1xf32>
    %32 = vector.broadcast %31 : vector<1x1xf32> to vector<3x1xf32>
    %33 = arith.subf %29, %32 : vector<3x1xf32>
    %34 = math.exp %33 : vector<3x1xf32>
    %cst_19 = arith.constant dense<0.000000e+00> : vector<1xf32>
    %35 = vector.multi_reduction <add>, %34, %cst_19 [0] : vector<3x1xf32> to vector<1xf32>
    %36 = vector.shape_cast %35 : vector<1xf32> to vector<1x1xf32>
    %37 = tpu.reciprocal %36 : vector<1x1xf32> -> vector<1x1xf32>
    %38 = vector.broadcast %37 : vector<1x1xf32> to vector<3x1xf32>
    %39 = arith.mulf %34, %38 : vector<3x1xf32>
    %40 = vector.shape_cast %20 : vector<24x32xf32> to vector<3x8x32xf32>
    %41 = vector.shape_cast %39 : vector<3x1xf32> to vector<3x1x1xf32>
    %42 = vector.broadcast %41 : vector<3x1x1xf32> to vector<3x8x32xf32>
    %43 = arith.mulf %40, %42 : vector<3x8x32xf32>
    %cst_20 = arith.constant dense<0.000000e+00> : vector<8x32xf32>
    %44 = vector.multi_reduction <add>, %43, %cst_20 [0] : vector<3x8x32xf32> to vector<8x32xf32>
    %c0_21 = arith.constant 0 : index
    %c0_22 = arith.constant 0 : index
    %45 = vector.load %arg5[%c0_21, %c0_22] : memref<8x32xf32, #tpu.memory_space<vmem>>, vector<8x32xf32>
    tpu.vector_store %arg5[%c0_21, %c0_22], %44 {strides = array<i32>} : memref<8x32xf32, #tpu.memory_space<vmem>>, vector<8x32xf32>,
    return
  }
}

</mosaic_0001>

<llo_original>
// kernel: tpu_custom_call.1
$region0: #{tpu_custom_call.1}
  #allocation0 [shape = 'u32[]', space=smem, size = 0x4, offset = 0x4, fixed_abs, tag = 'smem constant byte address 0x4 - core index']
  #allocation1 [shape = 'u32[144,128]{1,0:T(1,128)}', space=vmem, size = 0x12000, scoped, tag = 'internal scratch']
  %s0 = inlined_call_operand.vmem [shape: f32[3,8,8], index: 0, kind: input, shape index: {}]
  %s1 = inlined_call_operand.vmem [shape: f32[8,32], index: 1, kind: input, shape index: {}]
  %s2 = inlined_call_operand.vmem [shape: f32[32,128], index: 2, kind: input, shape index: {}]
  %s3 = inlined_call_operand.vmem [shape: f32[1,128], index: 3, kind: input, shape index: {}]
  %s4 = inlined_call_operand.vmem [shape: f32[128,1], index: 4, kind: input, shape index: {}]
  %s5 = inlined_call_operand.hbm [shape: f32[8,32], index: 5, kind: output, shape index: {}]
  %s6 = sld [smem:[#allocation0]]
  $region30: #{tpu_custom_call.1} parent=0
    _
  %s8 = ssub.s32 1, %s6
  %s9 = scalar_select 0, %s8, %s6
  $region1: #{tpu_custom_call.1} parent=0
    #allocation2 [shape = 'u8[4096]{0}', space=vmem, size = 0x1000, scoped, tag = 'output window, operand 0, single buffered']
    #allocation3 [shape = 's32[1]{0}', space=sflag, size = 0x4, scoped, tag = 'scoped memory for tpu_custom_call.1']
    %10 = vsyncpa [#allocation3], 0
    // Predicated region
    $region2: #{tpu_custom_call.1} parent=1 // pred_check
      _
    $region3: #{tpu_custom_call.1} parent=1 // pred_check_branch
      %12 = sbr.rel (0) target = $region5
    $region4: #{tpu_custom_call.1} parent=1 // pred_region
      _
    $region5: #{tpu_custom_call.1} parent=1 // pred_fallthru
      _
    // Predicated region
    $region6: #{tpu_custom_call.1} parent=1 // pred_check
      _
    $region7: #{tpu_custom_call.1} parent=1 // pred_check_branch
      %14 = sbr.rel (0) target = $region9
    $region8: #{tpu_custom_call.1} parent=1 // pred_region
      _
    $region9: #{tpu_custom_call.1} parent=1 // pred_fallthru
      _
    // Predicated region
    $region10: #{tpu_custom_call.1} parent=1 // pred_check
      _
    $region11: #{tpu_custom_call.1} parent=1 // pred_check_branch
      %16 = sbr.rel (0) target = $region13
    $region12: #{tpu_custom_call.1} parent=1 // pred_region
      _
    $region13: #{tpu_custom_call.1} parent=1 // pred_fallthru
      _
    // Predicated region
    $region14: #{tpu_custom_call.1} parent=1 // pred_check
      _
    $region15: #{tpu_custom_call.1} parent=1 // pred_check_branch
      %18 = sbr.rel (0) target = $region17
    $region16: #{tpu_custom_call.1} parent=1 // pred_region
      _
    $region17: #{tpu_custom_call.1} parent=1 // pred_fallthru
      _
    // Predicated region
    $region18: #{tpu_custom_call.1} parent=1 // pred_check
      _
    $region19: #{tpu_custom_call.1} parent=1 // pred_check_branch
      %20 = sbr.rel (0) target = $region21
    $region20: #{tpu_custom_call.1} parent=1 // pred_region
      _
    $region21: #{tpu_custom_call.1} parent=1 // pred_fallthru
      _
    %v21 = vld [vmem:[%s0] sm:$0xff]
    %v22 = vld [vmem:[%s0 + $0x8] sm:$0xff]
    %v23 = vld [vmem:[%s0 + $0x10] sm:$0xff]
    %v24 = vld [vmem:[%s1] sm:$0xff]
    %v25 = vld [vmem:[%s2] sm:$0xff]
    %v26 = vld [vmem:[%s2 + $0x8] sm:$0xff]
    %v27 = vld [vmem:[%s2 + $0x10] sm:$0xff]
    %v28 = vld [vmem:[%s2 + $0x18] sm:$0xff]
    %v29 = vld [vmem:[%s3] sm:$0x1]
    %v30 = vld [vmem:[%s4] sm:$0xff]
    %v31 = vld [vmem:[%s4 + $0x8] sm:$0xff]
    %v32 = vld [vmem:[%s4 + $0x10] sm:$0xff]
    %v33 = vld [vmem:[%s4 + $0x18] sm:$0xff]
    %v34 = vld [vmem:[%s4 + $0x20] sm:$0xff]
    %v35 = vld [vmem:[%s4 + $0x28] sm:$0xff]
    %v36 = vld [vmem:[%s4 + $0x30] sm:$0xff]
    %v37 = vld [vmem:[%s4 + $0x38] sm:$0xff]
    %v38 = vld [vmem:[%s4 + $0x40] sm:$0xff]
    %v39 = vld [vmem:[%s4 + $0x48] sm:$0xff]
    %v40 = vld [vmem:[%s4 + $0x50] sm:$0xff]
    %v41 = vld [vmem:[%s4 + $0x58] sm:$0xff]
    %v42 = vld [vmem:[%s4 + $0x60] sm:$0xff]
    %v43 = vld [vmem:[%s4 + $0x68] sm:$0xff]
    %v44 = vld [vmem:[%s4 + $0x70] sm:$0xff]
    %v45 = vld [vmem:[%s4 + $0x78] sm:$0xff]
    %vm46 = vcmask 64512
    %v47 = vsel %vm46, %v21, 0.0
    %48 = vadd.xlane.f32.xlu0 %v47
    %v49 = vpop.xlane.xlu0 %48
    %v50 = vsel %vm46, %v22, 0.0
    %51 = vadd.xlane.f32.xlu0 %v50
    %v52 = vpop.xlane.xlu0 %51
    %v53 = vsel %vm46, %v23, 0.0
    %54 = vadd.xlane.f32.xlu0 %v53
    %v55 = vpop.xlane.xlu0 %54
    %v56 = vmax.f32 %v49, 1.0
    %v57 = vmax.f32 %v52, 1.0
    %v58 = vmax.f32 %v55, 1.0
    %v59 = vrsqrt.pop %v56
    %v60 = vrsqrt.pop %v57
    %v61 = vrsqrt.pop %v58
    %v62 = vrot.slane %v47, 4
    %v63 = vadd.f32 %v47, %v62
    %v64 = vrot.slane %v63, 2
    %v65 = vadd.f32 %v63, %v64
    %v66 = vrot.slane %v65, 1
    %v67 = vadd.f32 %v65, %v66
    %v68 = vrot.slane %v50, 4
    %v69 = vadd.f32 %v50, %v68
    %v70 = vrot.slane %v69, 2
    %v71 = vadd.f32 %v69, %v70
    %v72 = vrot.slane %v71, 1
    %v73 = vadd.f32 %v71, %v72
    %v74 = vrot.slane %v53, 4
    %v75 = vadd.f32 %v53, %v74
    %v76 = vrot.slane %v75, 2
    %v77 = vadd.f32 %v75, %v76
    %v78 = vrot.slane %v77, 1
    %v79 = vadd.f32 %v77, %v78
    %v80 = vmax.f32 %v67, 1.0
    %v81 = vmax.f32 %v73, 1.0
    %v82 = vmax.f32 %v79, 1.0
    %v83 = vrsqrt.pop %v80
    %v84 = vrsqrt.pop %v81
    %v85 = vrsqrt.pop %v82
    %v86 = vmul.f32 %v21, %v59
    %v87 = vmul.f32 %v22, %v60
    %v88 = vmul.f32 %v23, %v61
    %v89 = vmul.f32 %v86, %v83
    %v90 = vmul.f32 %v87, %v84
    %v91 = vmul.f32 %v88, %v85
    %v93 = vsel %vm46, %v89, 0
    %v96 = vsel %vm46, %v90, 0
    %v99 = vsel %vm46, %v91, 0
    %101 = vmatprep.subr.mxu0 0.0
    %102 = vmatpush1.msra.mxu0 0.0
    %103 = vmatprep.subr.mxu0 0.0
    %104 = vmatpush1.msra.mxu0 0.0
    %105 = vmatprep.subr.mxu0 0.0
    %106 = vmatpush1.msra.mxu0 0.0
    %107 = vmatprep.subr.mxu0 0.0
    %108 = vmatpush1.msra.mxu0 0.0
    %109 = vmatprep.subr.mxu0 0.0
    %110 = vmatpush1.msra.mxu0 0.0
    %111 = vmatprep.subr.mxu0 0.0
    %112 = vmatpush1.msra.mxu0 0.0
    %113 = vmatprep.subr.mxu0 0.0
    %114 = vmatpush1.msra.mxu0 0.0
    %115 = vmatprep.subr.mxu0 0.0
    %116 = vmatpush1.msra.mxu0 0.0
    %117 = vmatprep.subr.mxu0 0.0
    %118 = vmatpush1.msra.mxu0 0.0
    %119 = vmatprep.subr.mxu0 0.0
    %120 = vmatpush1.msra.mxu0 0.0
    %121 = vmatprep.subr.mxu0 0.0
    %122 = vmatpush1.msra.mxu0 0.0
    %123 = vmatprep.subr.mxu0 0.0
    %124 = vmatpush1.msra.mxu0 0.0
    %125 = vmatprep.subr.mxu0 0.0
    %126 = vmatpush1.msra.mxu0 0.0
    %127 = vmatprep.subr.mxu0 0.0
    %128 = vmatpush1.msra.mxu0 0.0
    %129 = vmatprep.subr.mxu0 0.0
    %130 = vmatpush1.msra.mxu0 0.0
    %131 = vmatprep.subr.mxu0 0.0
    %132 = vmatpush1.msra.mxu0 %v24
    %133 = vmatprep.subr.mxu0 0.0
    %134 = vmatpush2.msra.mxu0 0.0
    %135 = vmatprep.subr.mxu0 0.0
    %136 = vmatpush2.msra.mxu0 0.0
    %137 = vmatprep.subr.mxu0 0.0
    %138 = vmatpush2.msra.mxu0 0.0
    %139 = vmatprep.subr.mxu0 0.0
    %140 = vmatpush2.msra.mxu0 0.0
    %141 = vmatprep.subr.mxu0 0.0
    %142 = vmatpush2.msra.mxu0 0.0
    %143 = vmatprep.subr.mxu0 0.0
    %144 = vmatpush2.msra.mxu0 0.0
    %145 = vmatprep.subr.mxu0 0.0
    %146 = vmatpush2.msra.mxu0 0.0
    %147 = vmatprep.subr.mxu0 0.0
    %148 = vmatpush2.msra.mxu0 0.0
    %149 = vmatprep.subr.mxu0 0.0
    %150 = vmatpush2.msra.mxu0 0.0
    %151 = vmatprep.subr.mxu0 0.0
    %152 = vmatpush2.msra.mxu0 0.0
    %153 = vmatprep.subr.mxu0 0.0
    %154 = vmatpush2.msra.mxu0 0.0
    %155 = vmatprep.subr.mxu0 0.0
    %156 = vmatpush2.msra.mxu0 0.0
    %157 = vmatprep.subr.mxu0 0.0
    %158 = vmatpush2.msra.mxu0 0.0
    %159 = vmatprep.subr.mxu0 0.0
    %160 = vmatpush2.msra.mxu0 0.0
    %161 = vmatprep.subr.mxu0 0.0
    %162 = vmatpush2.msra.mxu0 0.0
    %163 = vmatprep.subr.mxu0 0.0
    %164 = vmatpush2.msra.mxu0 0.0
    %165 = vmatprep.mubr.f32.mxu0 0.0
    %166 = vmatmul.mubr.f32.gmra.mxu0 %v93
    %v167 = vpop.f32.mrf.mxu0
    %v168 = vadd.f32 0.0, %v167
    %v169 = vpop.f32.mrf.mxu0
    %170 = vmatprep.mubr.f32.mxu0 0.0
    %171 = vmatmul.mubr.f32.gmra.mxu0 %v96
    %v172 = vpop.f32.mrf.mxu0
    %v173 = vadd.f32 0.0, %v172
    %v174 = vpop.f32.mrf.mxu0
    %175 = vmatprep.mubr.f32.mxu0 0.0
    %176 = vmatmul.mubr.f32.gmra.mxu0 %v99
    %v177 = vpop.f32.mrf.mxu0
    %v178 = vadd.f32 0.0, %v177
    %v179 = vpop.f32.mrf.mxu0
    %180 = vdwg.mxu0
    %v182 = vlaneseq
    %v183 = vshrl.u32 %v182, 7
    %v184 = vsub.s32 0, %v183
    %v185 = vrot.slane %v29, %v184
    %vm187 = vcmask 261120
    %v189 = vsel %vm187, %v168, 0
    %v192 = vsel %vm187, %v173, 0
    %v195 = vsel %vm187, %v178, 0
    %197 = vmatprep.subr.mxu0 0.0
    %198 = vmatpush1.msra.mxu0 0.0
    %199 = vmatprep.subr.mxu0 0.0
    %200 = vmatpush1.msra.mxu0 0.0
    %201 = vmatprep.subr.mxu0 0.0
    %202 = vmatpush1.msra.mxu0 0.0
    %203 = vmatprep.subr.mxu0 0.0
    %204 = vmatpush1.msra.mxu0 0.0
    %205 = vmatprep.subr.mxu0 0.0
    %206 = vmatpush1.msra.mxu0 0.0
    %207 = vmatprep.subr.mxu0 0.0
    %208 = vmatpush1.msra.mxu0 0.0
    %209 = vmatprep.subr.mxu0 0.0
    %210 = vmatpush1.msra.mxu0 0.0
    %211 = vmatprep.subr.mxu0 0.0
    %212 = vmatpush1.msra.mxu0 0.0
    %213 = vmatprep.subr.mxu0 0.0
    %214 = vmatpush1.msra.mxu0 0.0
    %215 = vmatprep.subr.mxu0 0.0
    %216 = vmatpush1.msra.mxu0 0.0
    %217 = vmatprep.subr.mxu0 0.0
    %218 = vmatpush1.msra.mxu0 0.0
    %219 = vmatprep.subr.mxu0 0.0
    %220 = vmatpush1.msra.mxu0 0.0
    %221 = vmatprep.subr.mxu0 0.0
    %222 = vmatpush1.msra.mxu0 %v28
    %223 = vmatprep.subr.mxu0 0.0
    %224 = vmatpush1.msra.mxu0 %v27
    %225 = vmatprep.subr.mxu0 0.0
    %226 = vmatpush1.msra.mxu0 %v26
    %227 = vmatprep.subr.mxu0 0.0
    %228 = vmatpush1.msra.mxu0 %v25
    %229 = vmatprep.subr.mxu0 0.0
    %230 = vmatpush2.msra.mxu0 0.0
    %231 = vmatprep.subr.mxu0 0.0
    %232 = vmatpush2.msra.mxu0 0.0
    %233 = vmatprep.subr.mxu0 0.0
    %234 = vmatpush2.msra.mxu0 0.0
    %235 = vmatprep.subr.mxu0 0.0
    %236 = vmatpush2.msra.mxu0 0.0
    %237 = vmatprep.subr.mxu0 0.0
    %238 = vmatpush2.msra.mxu0 0.0
    %239 = vmatprep.subr.mxu0 0.0
    %240 = vmatpush2.msra.mxu0 0.0
    %241 = vmatprep.subr.mxu0 0.0
    %242 = vmatpush2.msra.mxu0 0.0
    %243 = vmatprep.subr.mxu0 0.0
    %244 = vmatpush2.msra.mxu0 0.0
    %245 = vmatprep.subr.mxu0 0.0
    %246 = vmatpush2.msra.mxu0 0.0
    %247 = vmatprep.subr.mxu0 0.0
    %248 = vmatpush2.msra.mxu0 0.0
    %249 = vmatprep.subr.mxu0 0.0
    %250 = vmatpush2.msra.mxu0 0.0
    %251 = vmatprep.subr.mxu0 0.0
    %252 = vmatpush2.msra.mxu0 0.0
    %253 = vmatprep.subr.mxu0 0.0
    %254 = vmatpush2.msra.mxu0 0.0
    %255 = vmatprep.subr.mxu0 0.0
    %256 = vmatpush2.msra.mxu0 0.0
    %257 = vmatprep.subr.mxu0 0.0
    %258 = vmatpush2.msra.mxu0 0.0
    %259 = vmatprep.subr.mxu0 0.0
    %260 = vmatpush2.msra.mxu0 0.0
    %261 = vmatprep.mubr.f32.mxu0 0.0
    %262 = vmatmul.mubr.f32.gmra.mxu0 %v189
    %v263 = vpop.f32.mrf.mxu0
    %v264 = vadd.f32 %v185, %v263
    %v265 = vpop.f32.mrf.mxu0
    %266 = vmatprep.mubr.f32.mxu0 0.0
    %267 = vmatmul.mubr.f32.gmra.mxu0 %v192
    %v268 = vpop.f32.mrf.mxu0
    %v269 = vadd.f32 %v185, %v268
    %v270 = vpop.f32.mrf.mxu0
    %271 = vmatprep.mubr.f32.mxu0 0.0
    %272 = vmatmul.mubr.f32.gmra.mxu0 %v195
    %v273 = vpop.f32.mrf.mxu0
    %v274 = vadd.f32 %v185, %v273
    %v275 = vpop.f32.mrf.mxu0
    %276 = vdwg.mxu0
    %v277 = vtanh.pop %v264
    %v278 = vtanh.pop %v269
    %v279 = vtanh.pop %v274
    %v280 = vrot.slane %v277, 4
    %v281 = vadd.f32 %v277, %v280
    %v282 = vrot.slane %v281, 2
    %v283 = vadd.f32 %v281, %v282
    %v284 = vrot.slane %v283, 1
    %v285 = vadd.f32 %v283, %v284
    %v286 = vrot.slane %v278, 4
    %v287 = vadd.f32 %v278, %v286
    %v288 = vrot.slane %v287, 2
    %v289 = vadd.f32 %v287, %v288
    %v290 = vrot.slane %v289, 1
    %v291 = vadd.f32 %v289, %v290
    %v292 = vrot.slane %v279, 4
    %v293 = vadd.f32 %v279, %v292
    %v294 = vrot.slane %v293, 2
    %v295 = vadd.f32 %v293, %v294
    %v296 = vrot.slane %v295, 1
    %v297 = vadd.f32 %v295, %v296
    %v298 = vrcp.pop 8.0
    %v299 = vmul.f32 %v285, %v298
    %v300 = vmul.f32 %v291, %v298
    %v301 = vmul.f32 %v297, %v298
    %vm305 = vcmask 1041409
    %v306 = vsel %vm305, %v300, %v299
    %vm307 = vcmask 1042434
    %v308 = vsel %vm307, %v301, %v306
    %310 = vmatprep.subr.mxu0 0.0
    %311 = vmatpush1.msra.mxu0 %v45
    %312 = vmatprep.subr.mxu0 0.0
    %313 = vmatpush1.msra.mxu0 %v44
    %314 = vmatprep.subr.mxu0 0.0
    %315 = vmatpush1.msra.mxu0 %v43
    %316 = vmatprep.subr.mxu0 0.0
    %317 = vmatpush1.msra.mxu0 %v42
    %318 = vmatprep.subr.mxu0 0.0
    %319 = vmatpush1.msra.mxu0 %v41
    %320 = vmatprep.subr.mxu0 0.0
    %321 = vmatpush1.msra.mxu0 %v40
    %322 = vmatprep.subr.mxu0 0.0
    %323 = vmatpush1.msra.mxu0 %v39
    %324 = vmatprep.subr.mxu0 0.0
    %325 = vmatpush1.msra.mxu0 %v38
    %326 = vmatprep.subr.mxu0 0.0
    %327 = vmatpush1.msra.mxu0 %v37
    %328 = vmatprep.subr.mxu0 0.0
    %329 = vmatpush1.msra.mxu0 %v36
    %330 = vmatprep.subr.mxu0 0.0
    %331 = vmatpush1.msra.mxu0 %v35
    %332 = vmatprep.subr.mxu0 0.0
    %333 = vmatpush1.msra.mxu0 %v34
    %334 = vmatprep.subr.mxu0 0.0
    %335 = vmatpush1.msra.mxu0 %v33
    %336 = vmatprep.subr.mxu0 0.0
    %337 = vmatpush1.msra.mxu0 %v32
    %338 = vmatprep.subr.mxu0 0.0
    %339 = vmatpush1.msra.mxu0 %v31
    %340 = vmatprep.subr.mxu0 0.0
    %341 = vmatpush1.msra.mxu0 %v30
    %342 = vmatprep.subr.mxu0 0.0
    %343 = vmatpush2.msra.mxu0 0.0
    %344 = vmatprep.subr.mxu0 0.0
    %345 = vmatpush2.msra.mxu0 0.0
    %346 = vmatprep.subr.mxu0 0.0
    %347 = vmatpush2.msra.mxu0 0.0
    %348 = vmatprep.subr.mxu0 0.0
    %349 = vmatpush2.msra.mxu0 0.0
    %350 = vmatprep.subr.mxu0 0.0
    %351 = vmatpush2.msra.mxu0 0.0
    %352 = vmatprep.subr.mxu0 0.0
    %353 = vmatpush2.msra.mxu0 0.0
    %354 = vmatprep.subr.mxu0 0.0
    %355 = vmatpush2.msra.mxu0 0.0
    %356 = vmatprep.subr.mxu0 0.0
    %357 = vmatpush2.msra.mxu0 0.0
    %358 = vmatprep.subr.mxu0 0.0
    %359 = vmatpush2.msra.mxu0 0.0
    %360 = vmatprep.subr.mxu0 0.0
    %361 = vmatpush2.msra.mxu0 0.0
    %362 = vmatprep.subr.mxu0 0.0
    %363 = vmatpush2.msra.mxu0 0.0
    %364 = vmatprep.subr.mxu0 0.0
    %365 = vmatpush2.msra.mxu0 0.0
    %366 = vmatprep.subr.mxu0 0.0
    %367 = vmatpush2.msra.mxu0 0.0
    %368 = vmatprep.subr.mxu0 0.0
    %369 = vmatpush2.msra.mxu0 0.0
    %370 = vmatprep.subr.mxu0 0.0
    %371 = vmatpush2.msra.mxu0 0.0
    %372 = vmatprep.subr.mxu0 0.0
    %373 = vmatpush2.msra.mxu0 0.0
    %374 = vmatprep.mubr.f32.mxu0 0.0
    %375 = vmatmul.mubr.f32.gmra.mxu0 %v308
    %v376 = vpop.f32.mrf.mxu0
    %v377 = vadd.f32 0.0, %v376
    %v378 = vpop.f32.mrf.mxu0
    %379 = vdwg.mxu0
    %vm380 = vcmask 2048
    %v381 = vsel %vm380, %v377, -inf
    %v382 = vrot.slane %v381, 4
    %v383 = vmax.f32 %v381, %v382
    %v384 = vrot.slane %v383, 2
    %v385 = vmax.f32 %v383, %v384
    %v386 = vrot.slane %v385, 1
    %v387 = vmax.f32 %v385, %v386
    %v388 = vsub.f32 %v377, %v387
    %v389 = vmul.f32 %v388, 1.442695
    %v390 = vpow.pop %v389
    %v391 = vsel %vm380, %v390, 0.0
    %v392 = vrot.slane %v391, 4
    %v393 = vadd.f32 %v391, %v392
    %v394 = vrot.slane %v393, 2
    %v395 = vadd.f32 %v393, %v394
    %v396 = vrot.slane %v395, 1
    %v397 = vadd.f32 %v395, %v396
    %v398 = vrcp.pop %v397
    %v399 = vmul.f32 %v390, %v398
    %v402 = vunpack.c.l.s4 1966171168
    %v403 = vunpack.c.0.s8 %v402
    %v404 = vlaneseq
    %v405 = vshrl.u32 %v404, 7
    %v406 = vsub.s32 %v403, %v405
    %v407 = vrot.slane %v399, %v406
    %v408 = vcombine.high %v407, %v407
    %v410 = vunpack.c.l.s4 1966171168
    %v411 = vunpack.c.0.s8 %v410
    %v412 = vlaneseq
    %v413 = vshrl.u32 %v412, 7
    %v414 = vsub.s32 %v411, %v413
    %v415 = vrot.slane %v407, %v414
    %v417 = vunpack.c.l.s4 1966171168
    %v418 = vunpack.c.0.s8 %v417
    %v419 = vlaneseq
    %v420 = vshrl.u32 %v419, 7
    %v421 = vsub.s32 %v418, %v420
    %v422 = vrot.slane %v408, %v421
    %v423 = vcombine.high %v415, %v415
    %v424 = vlaneseq
    %v425 = vshrl.u32 %v424, 7
    %v426 = vsub.s32 0, %v425
    %v427 = vrot.slane %v415, %v426
    %v428 = vlaneseq
    %v429 = vshrl.u32 %v428, 7
    %v430 = vsub.s32 0, %v429
    %v431 = vrot.slane %v422, %v430
    %v432 = vlaneseq
    %v433 = vshrl.u32 %v432, 7
    %v434 = vsub.s32 0, %v433
    %v435 = vrot.slane %v423, %v434
    %436 = vset.pattern.permute.xlu0 0
    %437 = vperm.xlu0 %436, %v427
    %v438 = vpop.permute.xlu0 %437
    %440 = vset.pattern.permute.xlu0 0
    %441 = vperm.xlu0 %440, %v431
    %v442 = vpop.permute.xlu0 %441
    %444 = vset.pattern.permute.xlu0 0
    %445 = vperm.xlu0 %444, %v435
    %v446 = vpop.permute.xlu0 %445
    %v448 = vmul.f32 %v168, %v438
    %v449 = vmul.f32 %v173, %v442
    %v450 = vmul.f32 %v178, %v446
    %v451 = vsel %vm187, %v448, 0.0
    %v452 = vsel %vm187, %v449, 0.0
    %v453 = vadd.f32 %v451, %v452
    %v454 = vsel %vm187, %v450, 0.0
    %v455 = vadd.f32 %v453, %v454
    %456 = vst.msk [vmem:[#allocation2] sm:$0xff] %vm187, %v455
    // Predicated region
    $region22: #{tpu_custom_call.1} parent=1 // pred_check
      _
    $region23: #{tpu_custom_call.1} parent=1 // pred_check_branch
      %458 = sbr.rel (0) target = $region25
    $region24: #{tpu_custom_call.1} parent=1 // pred_region
      %s460 = ssub.s32 128, 128
      %461 = vsyncadd [#allocation3], %s460
      %s463 = sshll.u32 [#allocation2], 4
      %s464 = int_to_ptr.vmem [resolvable:$true] %s463
      %466 = dma.vmem_to_hbm [thread:$0]  %s464, 128, %s5, [#allocation3]
    $region25: #{tpu_custom_call.1} parent=1 // pred_fallthru
      _
    // Predicated region
    $region26: #{tpu_custom_call.1} parent=1 // pred_check
      _
    $region27: #{tpu_custom_call.1} parent=1 // pred_check_branch
      %468 = sbr.rel (0) target = $region29
    $region28: #{tpu_custom_call.1} parent=1 // pred_region
      %469 = dma.done [#allocation3], 128
    $region29: #{tpu_custom_call.1} parent=1 // pred_fallthru
      _
    %470 = vsyncpa [#allocation3], 1

</llo_original>
